<compile_context>
chip_gen: v7x
topology: tpu7x:2x2x1
jax: 0.10.0
libtpu: 0.0.40
codegen_flags: <defaults>
</compile_context>

<pallas_src>
import functools

import jax
import jax.numpy as jnp
from jax.experimental import pallas as pl
from jax.experimental.pallas import tpu as pltpu


def _round_up(x: int, m: int) -> int:
    return ((x + m - 1) // m) * m


# ---------- one-time hardware query (generation-dependent tiling) ----------
def _vmem_capacity_bytes() -> int:
    try:
        return int(pltpu.get_tpu_info().vmem_capacity_bytes)
    except Exception:
        return 64 * 1024 * 1024               # conservative (v7x-sized) fallback


_VMEM_BYTES = _vmem_capacity_bytes()
_SMALL_VMEM = _VMEM_BYTES < 96 * 1024 * 1024  # v7x: 64 MiB/TC; v5e/v6e: 128 MiB
_ROW_TILE_CAP = 512 if _SMALL_VMEM else 1024  # bigger row tiles where VMEM allows
_MIN_ROW_TILES = 2 if _SMALL_VMEM else 1      # v7x: 2 TCs — keep grid >= 2


def _choose_row_tile(n: int) -> int:
    """Row tile: <= _ROW_TILE_CAP rows, >= _MIN_ROW_TILES tiles for mid/large n
    (so both v7x TensorCores get work), rounded to 16 sublanes.  With a cdiv grid
    and ragged last block, at most tile_n-1 junk rows ever enter the pipeline."""
    num_tiles = max(pl.cdiv(n, _ROW_TILE_CAP),
                    _MIN_ROW_TILES if n > 256 else 1)
    return max(16, _round_up(pl.cdiv(n, num_tiles), 16))


def _mlp_fwd_kernel(x_ref, w1_ref, b1_ref, w2_ref, b2_ref, o_ref):
    """Fused Linear -> ReLU -> Linear on one row tile.

    x_ref  : [tile_n, d_in]   f32  (native layout, pipelined per grid step)
    w1_ref : [d_in,  d_h_p]   bf16 (VMEM-resident, single-buffered)
    b1_ref : [1,     d_h_p]   f32
    w2_ref : [d_h_p, d_out]   bf16 (VMEM-resident, single-buffered)
    b2_ref : [1,     d_out]   f32
    o_ref  : [tile_n, d_out]  f32  (exact output shape; ragged rows masked)
    """
    # Cast x to bf16 here (VPU cast hides under the MXU) instead of a separate
    # wrapper-side pad/convert pass over HBM.
    x_bf16 = x_ref[...].astype(w1_ref.dtype)
    # Layer 1: bf16 MXU inputs, f32 accumulation.
    h = jnp.dot(x_bf16, w1_ref[...], preferred_element_type=jnp.float32)
    h = jnp.maximum(h + b1_ref[...], 0.0)      # bias + ReLU stay in f32 (VPU)
    # Layer 2: cast only the dot *input* to bf16; keep the accumulate in f32.
    y = jnp.dot(h.astype(w2_ref.dtype), w2_ref[...],
                preferred_element_type=jnp.float32)
    o_ref[...] = (y + b2_ref[...]).astype(o_ref.dtype)


@functools.partial(jax.jit, static_argnames=("single_buffer_weights",))
def _mlp_forward(x, w1_t, b1, w2_t, b2, *, single_buffer_weights):
    """Jitted forward: x (f32, unpadded) -> fused Pallas MLP -> exact-shape output."""
    n, d_in = x.shape
    d_h_p = w1_t.shape[1]
    d_out = w2_t.shape[1]

    tile_n = _choose_row_tile(n)
    grid = (pl.cdiv(n, tile_n),)       # ragged last block; no row padding of x

    # Resident operands (constant index_map) need only one VMEM buffer.
    resident_kw = {"pipeline_mode": pl.Buffered(1)} if single_buffer_weights else {}

    # Explicit VMEM budget: weights (x1 or x2 buffers) + double-buffered x/out row
    # tiles + f32 intermediate h with headroom, clamped to this chip's capacity.
    w_bufs = 1 if single_buffer_weights else 2
    w_bytes = ((w1_t.size + w2_t.size) * w1_t.dtype.itemsize
               + (b1.size + b2.size) * 4)
    act_bytes = 2 * tile_n * (d_in + d_out) * 4
    scratch_bytes = 4 * tile_n * d_h_p * 4
    vmem_limit = min(int(0.9 * _VMEM_BYTES),
                     max(32 * 1024 * 1024,
                         w_bufs * w_bytes + act_bytes + scratch_bytes))

    # Output stays f32 to match the PyTorch module's forward dtype; emit bf16 here
    # if a downstream consumer allows it (halves output writeback).
    out = pl.pallas_call(
        _mlp_fwd_kernel,
        out_shape=jax.ShapeDtypeStruct((n, d_out), jnp.float32),
        grid=grid,
        in_specs=[
            # x row tile, native f32, pipelined (double-buffered) per grid step.
            pl.BlockSpec((tile_n, d_in), lambda i: (i, 0)),
            # Weights / biases: whole-array blocks, constant index -> resident.
            pl.BlockSpec((d_in, d_h_p), lambda i: (0, 0), **resident_kw),
            pl.BlockSpec((1, d_h_p), lambda i: (0, 0), **resident_kw),
            pl.BlockSpec((d_h_p, d_out), lambda i: (0, 0), **resident_kw),
            pl.BlockSpec((1, d_out), lambda i: (0, 0), **resident_kw),
        ],
        out_specs=pl.BlockSpec((tile_n, d_out), lambda i: (i, 0)),
        compiler_params=pltpu.CompilerParams(
            # Rows are independent; parallel lets the runtime shard them across
            # v7x's two TensorCores.
            # TODO(synk): if profiling shows one v7x TC idle, switch to an
            # explicit pl.core_map / CORE_PARALLEL split of the row axis.
            dimension_semantics=("parallel",),
            vmem_limit_bytes=vmem_limit,
        ),
    )(x, w1_t, b1, w2_t, b2)
    return out


class InnerMLP:
    """Concrete module wrapped by DDP: Linear(d_in->d_h) -> ReLU -> Linear(d_h->d_out)."""

    LANE = 128

    def __init__(self, d_in: int, d_hidden: int, d_out: int, key):
        k1, k2, k3, k4 = jax.random.split(key, 4)
        # Deterministic init mimicking nn.Linear's U(-1/sqrt(fan_in), 1/sqrt(fan_in)).
        lim1 = 1.0 / jnp.sqrt(jnp.float32(d_in))
        lim2 = 1.0 / jnp.sqrt(jnp.float32(d_hidden))
        # PyTorch convention: weight shape (out_features, in_features); f32 master copy.
        self.w1 = jax.random.uniform(k1, (d_hidden, d_in), jnp.float32, -lim1, lim1)
        self.b1 = jax.random.uniform(k2, (d_hidden,), jnp.float32, -lim1, lim1)
        self.w2 = jax.random.uniform(k3, (d_out, d_hidden), jnp.float32, -lim2, lim2)
        self.b2 = jax.random.uniform(k4, (d_out,), jnp.float32, -lim2, lim2)
        self.d_in, self.d_hidden, self.d_out = d_in, d_hidden, d_out

        # ---- hoisted, cached kernel-layout parameters (built once) ----
        # Only the *hidden* dim is zero-padded to a lane multiple (128); the padded
        # W1^T columns / b1 lanes / W2^T rows are exactly zero, so ReLU(0+0)=0 and
        # nothing leaks into the result.  d_in / d_out stay at their exact sizes so
        # x and the output need no wrapper-side pad/slice passes.
        d_h_p = _round_up(d_hidden, self.LANE)
        self.w1_t_p = jnp.pad(self.w1.T, ((0, 0), (0, d_h_p - d_hidden))).astype(jnp.bfloat16)
        self.w2_t_p = jnp.pad(self.w2.T, ((0, d_h_p - d_hidden), (0, 0))).astype(jnp.bfloat16)
        # Biases stay f32: bias add / ReLU run in f32 on the VPU (v5e has no bf16 VPU).
        self.b1_p = jnp.pad(self.b1, (0, d_h_p - d_hidden)).reshape(1, d_h_p)
        self.b2_p = self.b2.reshape(1, d_out)

        # Whether this jax build accepts pipeline_mode=pl.Buffered(1) for the
        # resident weights (v7x VMEM saver); probed on the first call.
        self._single_buffer_ok = None

    def parameters(self):
        return [self.w1, self.b1, self.w2, self.b2]

    def __call__(self, x):
        if self._single_buffer_ok is None:
            try:
                y = _mlp_forward(x, self.w1_t_p, self.b1_p, self.w2_t_p, self.b2_p,
                                 single_buffer_weights=True)
                jax.block_until_ready(y)
                self._single_buffer_ok = True
                return y
            except Exception:
                # Fall back to default double-buffered resident operands.
                self._single_buffer_ok = False
        return _mlp_forward(x, self.w1_t_p, self.b1_p, self.w2_t_p, self.b2_p,
                            single_buffer_weights=self._single_buffer_ok)


class DDPIndividualParameters:
    """JAX mirror of the PyTorch DDP wrapper; forward is a pass-through."""

    def __init__(self, module: InnerMLP):
        self.module = module
        self.handles = []
        self.world_size = jax.device_count()
        # dist.broadcast(p.data, src=0): identity for a single process with
        # replicated parameters (already identical across replicas).
        # TODO(synk): multi-chip parameter broadcast would use
        # pltpu.make_async_remote_copy from device 0 with get_barrier_semaphore
        # (collective_id set), issued from one TensorCore via
        # pltpu.run_on_first_core on v7x to avoid the 2 TCs contending for ICI.

    def forward(self, *args, **kwargs):
        return self.module(*args, **kwargs)

    __call__ = forward

    def finish_gradient_synchronization(self) -> None:
        # TODO(synk): the per-parameter async grad all_reduce hooks belong to the
        # backward pass; on TPU they would be a ring all-reduce built from
        # pltpu.make_async_remote_copy + per-peer DMA semaphores, overlapped
        # per-parameter with remaining backward compute, then a divide by
        # world_size.  No forward-pass Pallas equivalent exists.
        self.handles.clear()


if __name__ == "__main__":
    key = jax.random.PRNGKey(0)
    k_param, k_x = jax.random.split(key)

    d_in, d_hidden, d_out, batch = 32, 64, 32, 8
    model = DDPIndividualParameters(InnerMLP(d_in, d_hidden, d_out, k_param))

    x = jax.random.normal(k_x, (batch, d_in), dtype=jnp.float32)

    y = model(x)
    y = jax.block_until_ready(y)

    # Cross-check against a plain-JAX f32 reference of the same forward.
    # (Kernel feeds bf16 into the MXU with f32 accumulation; x and the post-ReLU
    #  intermediate are each rounded to bf16 -> ~1e-2-level relative error.)
    ref = (jnp.maximum(x @ model.module.w1.T + model.module.b1, 0.0)
           @ model.module.w2.T + model.module.b2)
    assert y.shape == (batch, d_out)
    assert jnp.allclose(y, ref, atol=2e-2, rtol=2e-2), float(jnp.max(jnp.abs(y - ref)))

    model.finish_gradient_synchronization()
    print("KERNEL_OK")
</pallas_src>

<mosaic_0001>
module attributes {stable_mosaic.version = 11 : i64} {
  func.func @_mlp_fwd_kernel(%arg0: i32, %arg1: memref<16x32xf32, #tpu.memory_space<vmem>>, %arg2: memref<32x128xbf16, #tpu.memory_space<vmem>>, %arg3: memref<1x128xf32, #tpu.memory_space<vmem>>, %arg4: memref<128x32xbf16, #tpu.memory_space<vmem>>, %arg5: memref<1x32xf32, #tpu.memory_space<vmem>>, %arg6: memref<16x32xf32, #tpu.memory_space<vmem>>) attributes {dimension_semantics = [#tpu.dimension_semantics<parallel>], iteration_bounds = array<i64: 1>, scalar_prefetch = 0 : i64, scratch_operands = 0 : i64, tpu.core_type = #tpu.core_type<tc>, window_params = [{transform_indices = @transform_0, window_bounds = array<i64: 16, 32>}, {pipeline_mode = #tpu.pipeline_mode<synchronous>, transform_indices = @transform_1, window_bounds = array<i64: 32, 128>}, {pipeline_mode = #tpu.pipeline_mode<synchronous>, transform_indices = @transform_2, window_bounds = array<i64: 1, 128>}, {pipeline_mode = #tpu.pipeline_mode<synchronous>, transform_indices = @transform_3, window_bounds = array<i64: 128, 32>}, {pipeline_mode = #tpu.pipeline_mode<synchronous>, transform_indices = @transform_4, window_bounds = array<i64: 1, 32>}, {transform_indices = @transform_5, window_bounds = array<i64: 16, 32>}]} {
    %c0 = arith.constant 0 : index
    %c0_0 = arith.constant 0 : index
    %0 = vector.load %arg1[%c0, %c0_0] : memref<16x32xf32, #tpu.memory_space<vmem>>, vector<16x32xf32>
    %1 = arith.truncf %0 : vector<16x32xf32> to vector<16x32xbf16>
    %c0_1 = arith.constant 0 : index
    %c0_2 = arith.constant 0 : index
    %2 = vector.load %arg2[%c0_1, %c0_2] : memref<32x128xbf16, #tpu.memory_space<vmem>>, vector<32x128xbf16>
    %cst = arith.constant dense<0.000000e+00> : vector<16x128xf32>
    %3 = tpu.matmul %1, %2, %cst {dimension_numbers = #tpu.dot_dimension_numbers<[1], [0], [0], [1], [0, 0, 1, 1], [], []>} : vector<16x32xbf16>, vector<32x128xbf16>, vector<16x128xf32> -> vector<16x128xf32>
    %c0_3 = arith.constant 0 : index
    %c0_4 = arith.constant 0 : index
    %4 = vector.load %arg3[%c0_3, %c0_4] : memref<1x128xf32, #tpu.memory_space<vmem>>, vector<1x128xf32>
    %5 = vector.broadcast %4 : vector<1x128xf32> to vector<16x128xf32>
    %6 = arith.addf %3, %5 : vector<16x128xf32>
    %cst_5 = arith.constant 0.000000e+00 : f32
    %7 = vector.broadcast %cst_5 : f32 to vector<16x128xf32>
    %8 = arith.maximumf %6, %7 : vector<16x128xf32>
    %9 = arith.truncf %8 : vector<16x128xf32> to vector<16x128xbf16>
    %c0_6 = arith.constant 0 : index
    %c0_7 = arith.constant 0 : index
    %10 = vector.load %arg4[%c0_6, %c0_7] : memref<128x32xbf16, #tpu.memory_space<vmem>>, vector<128x32xbf16>
    %cst_8 = arith.constant dense<0.000000e+00> : vector<16x32xf32>
    %11 = tpu.matmul %9, %10, %cst_8 {dimension_numbers = #tpu.dot_dimension_numbers<[1], [0], [0], [1], [0, 0, 1, 1], [], []>} : vector<16x128xbf16>, vector<128x32xbf16>, vector<16x32xf32> -> vector<16x32xf32>
    %c0_9 = arith.constant 0 : index
    %c0_10 = arith.constant 0 : index
    %12 = vector.load %arg5[%c0_9, %c0_10] : memref<1x32xf32, #tpu.memory_space<vmem>>, vector<1x32xf32>
    %13 = vector.broadcast %12 : vector<1x32xf32> to vector<16x32xf32>
    %14 = arith.addf %11, %13 : vector<16x32xf32>
    %c0_11 = arith.constant 0 : index
    %c0_12 = arith.constant 0 : index
    %15 = vector.load %arg6[%c0_11, %c0_12] : memref<16x32xf32, #tpu.memory_space<vmem>>, vector<16x32xf32>
    tpu.vector_store %arg6[%c0_11, %c0_12], %14 {strides = array<i32>} : memref<16x32xf32, #tpu.memory_space<vmem>>, vector<16x32xf32>,
    return
  }
  func.func @transform_0(%arg0: i32) -> (i32, i32) {
    %c0_i32 = arith.constant 0 : i32
    %c0_i32_0 = arith.constant 0 : i32
    return %arg0, %c0_i32 : i32, i32
  }
  func.func @transform_1(%arg0: i32) -> (i32, i32) {
    %c0_i32 = arith.constant 0 : i32
    %c0_i32_0 = arith.constant 0 : i32
    %c0_i32_1 = arith.constant 0 : i32
    return %c0_i32, %c0_i32_0 : i32, i32
  }
  func.func @transform_2(%arg0: i32) -> (i32, i32) {
    %c0_i32 = arith.constant 0 : i32
    %c0_i32_0 = arith.constant 0 : i32
    %c0_i32_1 = arith.constant 0 : i32
    return %c0_i32, %c0_i32_0 : i32, i32
  }
  func.func @transform_3(%arg0: i32) -> (i32, i32) {
    %c0_i32 = arith.constant 0 : i32
    %c0_i32_0 = arith.constant 0 : i32
    %c0_i32_1 = arith.constant 0 : i32
    return %c0_i32, %c0_i32_0 : i32, i32
  }
  func.func @transform_4(%arg0: i32) -> (i32, i32) {
    %c0_i32 = arith.constant 0 : i32
    %c0_i32_0 = arith.constant 0 : i32
    %c0_i32_1 = arith.constant 0 : i32
    return %c0_i32, %c0_i32_0 : i32, i32
  }
  func.func @transform_5(%arg0: i32) -> (i32, i32) {
    %c0_i32 = arith.constant 0 : i32
    %c0_i32_0 = arith.constant 0 : i32
    return %arg0, %c0_i32 : i32, i32
  }
}

module attributes {stable_mosaic.version = 11 : i64} {
  func.func @_mlp_fwd_kernel(%arg0: i32, %arg1: memref<16x32xf32, #tpu.memory_space<vmem>>, %arg2: memref<32x128xbf16, #tpu.memory_space<vmem>>, %arg3: memref<1x128xf32, #tpu.memory_space<vmem>>, %arg4: memref<128x32xbf16, #tpu.memory_space<vmem>>, %arg5: memref<1x32xf32, #tpu.memory_space<vmem>>, %arg6: memref<16x32xf32, #tpu.memory_space<vmem>>) attributes {dimension_semantics = [#tpu.dimension_semantics<parallel>], iteration_bounds = array<i64: 1>, scalar_prefetch = 0 : i64, scratch_operands = 0 : i64, tpu.core_type = #tpu.core_type<tc>, window_params = [{transform_indices = @transform_0, window_bounds = array<i64: 16, 32>}, {pipeline_mode = #tpu.pipeline_mode<synchronous>, transform_indices = @transform_1, window_bounds = array<i64: 32, 128>}, {pipeline_mode = #tpu.pipeline_mode<synchronous>, transform_indices = @transform_2, window_bounds = array<i64: 1, 128>}, {pipeline_mode = #tpu.pipeline_mode<synchronous>, transform_indices = @transform_3, window_bounds = array<i64: 128, 32>}, {pipeline_mode = #tpu.pipeline_mode<synchronous>, transform_indices = @transform_4, window_bounds = array<i64: 1, 32>}, {transform_indices = @transform_5, window_bounds = array<i64: 16, 32>}]} {
    %c0 = arith.constant 0 : index
    %c0_0 = arith.constant 0 : index
    %0 = vector.load %arg1[%c0, %c0_0] : memref<16x32xf32, #tpu.memory_space<vmem>>, vector<16x32xf32>
    %1 = arith.truncf %0 : vector<16x32xf32> to vector<16x32xbf16>
    %c0_1 = arith.constant 0 : index
    %c0_2 = arith.constant 0 : index
    %2 = vector.load %arg2[%c0_1, %c0_2] : memref<32x128xbf16, #tpu.memory_space<vmem>>, vector<32x128xbf16>
    %cst = arith.constant dense<0.000000e+00> : vector<16x128xf32>
    %3 = tpu.matmul %1, %2, %cst {dimension_numbers = #tpu.dot_dimension_numbers<[1], [0], [0], [1], [0, 0, 1, 1], [], []>} : vector<16x32xbf16>, vector<32x128xbf16>, vector<16x128xf32> -> vector<16x128xf32>
    %c0_3 = arith.constant 0 : index
    %c0_4 = arith.constant 0 : index
    %4 = vector.load %arg3[%c0_3, %c0_4] : memref<1x128xf32, #tpu.memory_space<vmem>>, vector<1x128xf32>
    %5 = vector.broadcast %4 : vector<1x128xf32> to vector<16x128xf32>
    %6 = arith.addf %3, %5 : vector<16x128xf32>
    %cst_5 = arith.constant 0.000000e+00 : f32
    %7 = vector.broadcast %cst_5 : f32 to vector<16x128xf32>
    %8 = arith.maximumf %6, %7 : vector<16x128xf32>
    %9 = arith.truncf %8 : vector<16x128xf32> to vector<16x128xbf16>
    %c0_6 = arith.constant 0 : index
    %c0_7 = arith.constant 0 : index
    %10 = vector.load %arg4[%c0_6, %c0_7] : memref<128x32xbf16, #tpu.memory_space<vmem>>, vector<128x32xbf16>
    %cst_8 = arith.constant dense<0.000000e+00> : vector<16x32xf32>
    %11 = tpu.matmul %9, %10, %cst_8 {dimension_numbers = #tpu.dot_dimension_numbers<[1], [0], [0], [1], [0, 0, 1, 1], [], []>} : vector<16x128xbf16>, vector<128x32xbf16>, vector<16x32xf32> -> vector<16x32xf32>
    %c0_9 = arith.constant 0 : index
    %c0_10 = arith.constant 0 : index
    %12 = vector.load %arg5[%c0_9, %c0_10] : memref<1x32xf32, #tpu.memory_space<vmem>>, vector<1x32xf32>
    %13 = vector.broadcast %12 : vector<1x32xf32> to vector<16x32xf32>
    %14 = arith.addf %11, %13 : vector<16x32xf32>
    %c0_11 = arith.constant 0 : index
    %c0_12 = arith.constant 0 : index
    %15 = vector.load %arg6[%c0_11, %c0_12] : memref<16x32xf32, #tpu.memory_space<vmem>>, vector<16x32xf32>
    tpu.vector_store %arg6[%c0_11, %c0_12], %14 {strides = array<i32>} : memref<16x32xf32, #tpu.memory_space<vmem>>, vector<16x32xf32>,
    return
  }
  func.func @transform_0(%arg0: i32) -> (i32, i32) {
    %c0_i32 = arith.constant 0 : i32
    %c0_i32_0 = arith.constant 0 : i32
    return %arg0, %c0_i32 : i32, i32
  }
  func.func @transform_1(%arg0: i32) -> (i32, i32) {
    %c0_i32 = arith.constant 0 : i32
    %c0_i32_0 = arith.constant 0 : i32
    %c0_i32_1 = arith.constant 0 : i32
    return %c0_i32, %c0_i32_0 : i32, i32
  }
  func.func @transform_2(%arg0: i32) -> (i32, i32) {
    %c0_i32 = arith.constant 0 : i32
    %c0_i32_0 = arith.constant 0 : i32
    %c0_i32_1 = arith.constant 0 : i32
    return %c0_i32, %c0_i32_0 : i32, i32
  }
  func.func @transform_3(%arg0: i32) -> (i32, i32) {
    %c0_i32 = arith.constant 0 : i32
    %c0_i32_0 = arith.constant 0 : i32
    %c0_i32_1 = arith.constant 0 : i32
    return %c0_i32, %c0_i32_0 : i32, i32
  }
  func.func @transform_4(%arg0: i32) -> (i32, i32) {
    %c0_i32 = arith.constant 0 : i32
    %c0_i32_0 = arith.constant 0 : i32
    %c0_i32_1 = arith.constant 0 : i32
    return %c0_i32, %c0_i32_0 : i32, i32
  }
  func.func @transform_5(%arg0: i32) -> (i32, i32) {
    %c0_i32 = arith.constant 0 : i32
    %c0_i32_0 = arith.constant 0 : i32
    return %arg0, %c0_i32 : i32, i32
  }
}

</mosaic_0001>

<llo_original>
// kernel: _mlp_forward.1
$region0: #{_mlp_forward.1}
  #allocation0 [shape = 'u32[]', space=smem, size = 0x4, offset = 0x4, fixed_abs, tag = 'smem constant byte address 0x4 - core index']
  #allocation1 [shape = 'u32[144,128]{1,0:T(1,128)}', space=vmem, size = 0x12000, scoped, tag = 'internal scratch']
  %s0 = inlined_call_operand.vmem [shape: f32[8,32], index: 0, kind: input, shape index: {}]
  %s1 = inlined_call_operand.vmem [shape: bf16[32,128], index: 1, kind: input, shape index: {}]
  %s2 = inlined_call_operand.vmem [shape: f32[1,128], index: 2, kind: input, shape index: {}]
  %s3 = inlined_call_operand.vmem [shape: bf16[128,32], index: 3, kind: input, shape index: {}]
  %s4 = inlined_call_operand.vmem [shape: f32[1,32], index: 4, kind: input, shape index: {}]
  %s5 = inlined_call_operand.hbm [shape: f32[8,32], index: 5, kind: output, shape index: {}]
  %s6 = sld [smem:[#allocation0]]
  $region30: #{_mlp_forward.1} parent=0
    _
  %s8 = ssub.s32 1, %s6
  %s9 = scalar_select 0, %s8, %s6
  $region1: #{_mlp_forward.1} parent=0
    #allocation2 [shape = 'u8[8192]{0}', space=vmem, size = 0x2000, scoped, tag = 'output window, operand 0, single buffered']
    #allocation3 [shape = 's32[1]{0}', space=sflag, size = 0x4, scoped, tag = 'scoped memory for _mlp_forward.1']
    %10 = vsyncpa [#allocation3], 0
    // Predicated region
    $region2: #{_mlp_forward.1} parent=1 // pred_check
      _
    $region3: #{_mlp_forward.1} parent=1 // pred_check_branch
      %12 = sbr.rel (0) target = $region5
    $region4: #{_mlp_forward.1} parent=1 // pred_region
      _
    $region5: #{_mlp_forward.1} parent=1 // pred_fallthru
      _
    // Predicated region
    $region6: #{_mlp_forward.1} parent=1 // pred_check
      _
    $region7: #{_mlp_forward.1} parent=1 // pred_check_branch
      %14 = sbr.rel (0) target = $region9
    $region8: #{_mlp_forward.1} parent=1 // pred_region
      _
    $region9: #{_mlp_forward.1} parent=1 // pred_fallthru
      _
    // Predicated region
    $region10: #{_mlp_forward.1} parent=1 // pred_check
      _
    $region11: #{_mlp_forward.1} parent=1 // pred_check_branch
      %16 = sbr.rel (0) target = $region13
    $region12: #{_mlp_forward.1} parent=1 // pred_region
      _
    $region13: #{_mlp_forward.1} parent=1 // pred_fallthru
      _
    // Predicated region
    $region14: #{_mlp_forward.1} parent=1 // pred_check
      _
    $region15: #{_mlp_forward.1} parent=1 // pred_check_branch
      %18 = sbr.rel (0) target = $region17
    $region16: #{_mlp_forward.1} parent=1 // pred_region
      _
    $region17: #{_mlp_forward.1} parent=1 // pred_fallthru
      _
    // Predicated region
    $region18: #{_mlp_forward.1} parent=1 // pred_check
      _
    $region19: #{_mlp_forward.1} parent=1 // pred_check_branch
      %20 = sbr.rel (0) target = $region21
    $region20: #{_mlp_forward.1} parent=1 // pred_region
      _
    $region21: #{_mlp_forward.1} parent=1 // pred_fallthru
      _
    %v22 = vld [vmem:[%s0] sm:$0xff]
    %v23 = vld [vmem:[%s0 + $0x8] sm:$0xff]
    %v24 = vpack.c.bf16 %v23, %v22
    %v25 = vld [vmem:[%s1] sm:$0xf]
    %v26 = vld [vmem:[%s1 + $0x4] sm:$0xf]
    %v27 = vld [vmem:[%s1 + $0x8] sm:$0xf]
    %v28 = vld [vmem:[%s1 + $0xc] sm:$0xf]
    %v29 = vld [vmem:[%s2] sm:$0x1]
    %v31 = vlaneseq
    %v32 = vshrl.u32 %v31, 7
    %v33 = vsub.s32 0, %v32
    %v34 = vrot.slane %v29, %v33
    %v40 = vunpack.c.l.b16 %v25
    %v41 = vunpack.c.l.b16 %v26
    %v42 = vunpack.c.l.b16 %v27
    %v43 = vunpack.c.l.b16 %v28
    %v44 = vpack.c.b16 %v41, %v40
    %v45 = vpack.c.b16 %v43, %v42
    %vm48 = vcmask 261120
    %v50 = vsel %vm48, %v24, 0
    %52 = vmatprep.subr.bf16.mxu0 0
    %53 = vmatpush1.bf16.msra.mxu0 %v44
    %54 = vmatprep.subr.bf16.mxu0 0
    %55 = vmatpush1.bf16.msra.mxu0 %v45
    %56 = vmatprep.subr.bf16.mxu0 0
    %57 = vmatpush1.bf16.msra.mxu0 0
    %58 = vmatprep.subr.bf16.mxu0 0
    %59 = vmatpush1.bf16.msra.mxu0 0
    %60 = vmatprep.subr.bf16.mxu0 0
    %61 = vmatpush1.bf16.msra.mxu0 0
    %62 = vmatprep.subr.bf16.mxu0 0
    %63 = vmatpush1.bf16.msra.mxu0 0
    %64 = vmatprep.subr.bf16.mxu0 0
    %65 = vmatpush1.bf16.msra.mxu0 0
    %66 = vmatprep.subr.bf16.mxu0 0
    %67 = vmatpush1.bf16.msra.mxu0 0
    %68 = vmatprep.subr.bf16.mxu0 0
    %69 = vmatpush1.bf16.msra.mxu0 0
    %70 = vmatprep.subr.bf16.mxu0 0
    %71 = vmatpush1.bf16.msra.mxu0 0
    %72 = vmatprep.subr.bf16.mxu0 0
    %73 = vmatpush1.bf16.msra.mxu0 0
    %74 = vmatprep.subr.bf16.mxu0 0
    %75 = vmatpush1.bf16.msra.mxu0 0
    %76 = vmatprep.subr.bf16.mxu0 0
    %77 = vmatpush1.bf16.msra.mxu0 0
    %78 = vmatprep.subr.bf16.mxu0 0
    %79 = vmatpush1.bf16.msra.mxu0 0
    %80 = vmatprep.subr.bf16.mxu0 0
    %81 = vmatpush1.bf16.msra.mxu0 0
    %82 = vmatprep.subr.bf16.mxu0 0
    %83 = vmatpush1.bf16.msra.mxu0 0
    %84 = vmatprep.mubr.bf16.mxu0 0
    %85 = vmatmul.mubr.bf16.gmra.mrb[0].mxu0 %v50
    %v86 = vpop.f32.mrb[0].mxu0
    %v87 = vadd.f32 %v34, %v86
    %v88 = vpop.f32.mrb[0].mxu0
    %v89 = vpop.f32.mrb[0].mxu0
    %v90 = vadd.f32 %v34, %v89
    %v91 = vpop.f32.mrb[0].mxu0
    %92 = vdwg.mxu0
    %v93 = vmax.f32 %v87, 0.0
    %v94 = vmax.f32 %v90, 0.0
    %v95 = vpack.c.bf16 %v94, %v93
    %v96 = vld [vmem:[%s3] sm:$0xf]
    %v97 = vld [vmem:[%s3 + $0x4] sm:$0xf]
    %v98 = vld [vmem:[%s3 + $0x8] sm:$0xf]
    %v99 = vld [vmem:[%s3 + $0xc] sm:$0xf]
    %v100 = vld [vmem:[%s3 + $0x10] sm:$0xf]
    %v101 = vld [vmem:[%s3 + $0x14] sm:$0xf]
    %v102 = vld [vmem:[%s3 + $0x18] sm:$0xf]
    %v103 = vld [vmem:[%s3 + $0x1c] sm:$0xf]
    %v104 = vld [vmem:[%s3 + $0x20] sm:$0xf]
    %v105 = vld [vmem:[%s3 + $0x24] sm:$0xf]
    %v106 = vld [vmem:[%s3 + $0x28] sm:$0xf]
    %v107 = vld [vmem:[%s3 + $0x2c] sm:$0xf]
    %v108 = vld [vmem:[%s3 + $0x30] sm:$0xf]
    %v109 = vld [vmem:[%s3 + $0x34] sm:$0xf]
    %v110 = vld [vmem:[%s3 + $0x38] sm:$0xf]
    %v111 = vld [vmem:[%s3 + $0x3c] sm:$0xf]
    %v112 = vld [vmem:[%s4] sm:$0x1]
    %v114 = vlaneseq
    %v115 = vshrl.u32 %v114, 7
    %v116 = vsub.s32 0, %v115
    %v117 = vrot.slane %v112, %v116
    %v135 = vunpack.c.l.b16 %v96
    %v136 = vunpack.c.l.b16 %v97
    %v137 = vunpack.c.l.b16 %v98
    %v138 = vunpack.c.l.b16 %v99
    %v139 = vunpack.c.l.b16 %v100
    %v140 = vunpack.c.l.b16 %v101
    %v141 = vunpack.c.l.b16 %v102
    %v142 = vunpack.c.l.b16 %v103
    %v143 = vunpack.c.l.b16 %v104
    %v144 = vunpack.c.l.b16 %v105
    %v145 = vunpack.c.l.b16 %v106
    %v146 = vunpack.c.l.b16 %v107
    %v147 = vunpack.c.l.b16 %v108
    %v148 = vunpack.c.l.b16 %v109
    %v149 = vunpack.c.l.b16 %v110
    %v150 = vunpack.c.l.b16 %v111
    %v151 = vpack.c.b16 %v136, %v135
    %v152 = vpack.c.b16 %v138, %v137
    %v153 = vpack.c.b16 %v140, %v139
    %v154 = vpack.c.b16 %v142, %v141
    %v155 = vpack.c.b16 %v144, %v143
    %v156 = vpack.c.b16 %v146, %v145
    %v157 = vpack.c.b16 %v148, %v147
    %v158 = vpack.c.b16 %v150, %v149
    %167 = vmatprep.subr.bf16.mxu0 0
    %168 = vmatpush1.bf16.msra.mxu0 %v151
    %169 = vmatprep.subr.bf16.mxu0 0
    %170 = vmatpush1.bf16.msra.mxu0 %v152
    %171 = vmatprep.subr.bf16.mxu0 0
    %172 = vmatpush1.bf16.msra.mxu0 %v153
    %173 = vmatprep.subr.bf16.mxu0 0
    %174 = vmatpush1.bf16.msra.mxu0 %v154
    %175 = vmatprep.subr.bf16.mxu0 0
    %176 = vmatpush1.bf16.msra.mxu0 %v155
    %177 = vmatprep.subr.bf16.mxu0 0
    %178 = vmatpush1.bf16.msra.mxu0 %v156
    %179 = vmatprep.subr.bf16.mxu0 0
    %180 = vmatpush1.bf16.msra.mxu0 %v157
    %181 = vmatprep.subr.bf16.mxu0 0
    %182 = vmatpush1.bf16.msra.mxu0 %v158
    %183 = vmatprep.subr.bf16.mxu0 0
    %184 = vmatpush1.bf16.msra.mxu0 0
    %185 = vmatprep.subr.bf16.mxu0 0
    %186 = vmatpush1.bf16.msra.mxu0 0
    %187 = vmatprep.subr.bf16.mxu0 0
    %188 = vmatpush1.bf16.msra.mxu0 0
    %189 = vmatprep.subr.bf16.mxu0 0
    %190 = vmatpush1.bf16.msra.mxu0 0
    %191 = vmatprep.subr.bf16.mxu0 0
    %192 = vmatpush1.bf16.msra.mxu0 0
    %193 = vmatprep.subr.bf16.mxu0 0
    %194 = vmatpush1.bf16.msra.mxu0 0
    %195 = vmatprep.subr.bf16.mxu0 0
    %196 = vmatpush1.bf16.msra.mxu0 0
    %197 = vmatprep.subr.bf16.mxu0 0
    %198 = vmatpush1.bf16.msra.mxu0 0
    %199 = vmatprep.mubr.bf16.mxu0 0
    %200 = vmatmul.mubr.bf16.gmra.mrb[0].mxu0 %v95
    %v201 = vpop.f32.mrb[0].mxu0
    %v202 = vadd.f32 %v117, %v201
    %v203 = vpop.f32.mrb[0].mxu0
    %v204 = vpop.f32.mrb[0].mxu0
    %v205 = vadd.f32 %v117, %v204
    %v206 = vpop.f32.mrb[0].mxu0
    %207 = vdwg.mxu0
    %208 = vst.msk [vmem:[#allocation2] sm:$0xff] %vm48, %v202
    %209 = vst.msk [vmem:[#allocation2 + $0x8] sm:$0xff] %vm48, %v205
    // Predicated region
    $region22: #{_mlp_forward.1} parent=1 // pred_check
      _
    $region23: #{_mlp_forward.1} parent=1 // pred_check_branch
      %211 = sbr.rel (0) target = $region25
    $region24: #{_mlp_forward.1} parent=1 // pred_region
      %s213 = ssub.s32 256, 128
      %214 = vsyncadd [#allocation3], %s213
      %s215 = sshll.u32 [#allocation2], 4
      %s216 = int_to_ptr.vmem [resolvable:$true] %s215
      %221 = dma.vmem_to_hbm [thread:$0]  %s216, 128, %s5, [#allocation3], 128, 128, 8
    $region25: #{_mlp_forward.1} parent=1 // pred_fallthru
      _
    // Predicated region
    $region26: #{_mlp_forward.1} parent=1 // pred_check
      _
    $region27: #{_mlp_forward.1} parent=1 // pred_check_branch
      %223 = sbr.rel (0) target = $region29
    $region28: #{_mlp_forward.1} parent=1 // pred_region
      %224 = dma.done [#allocation3], 256
    $region29: #{_mlp_forward.1} parent=1 // pred_fallthru
      _
    %225 = vsyncpa [#allocation3], 1

// kernel: _mlp_forward.1
$region0: #{_mlp_forward.1}
  #allocation0 [shape = 'u32[]', space=smem, size = 0x4, offset = 0x4, fixed_abs, tag = 'smem constant byte address 0x4 - core index']
  #allocation1 [shape = 'u32[144,128]{1,0:T(1,128)}', space=vmem, size = 0x12000, scoped, tag = 'internal scratch']
  %s0 = inlined_call_operand.vmem [shape: f32[8,32], index: 0, kind: input, shape index: {}]
  %s1 = inlined_call_operand.vmem [shape: bf16[32,128], index: 1, kind: input, shape index: {}]
  %s2 = inlined_call_operand.vmem [shape: f32[1,128], index: 2, kind: input, shape index: {}]
  %s3 = inlined_call_operand.vmem [shape: bf16[128,32], index: 3, kind: input, shape index: {}]
  %s4 = inlined_call_operand.vmem [shape: f32[1,32], index: 4, kind: input, shape index: {}]
  %s5 = inlined_call_operand.hbm [shape: f32[8,32], index: 5, kind: output, shape index: {}]
  %s6 = sld [smem:[#allocation0]]
  $region30: #{_mlp_forward.1} parent=0
    _
  %s8 = ssub.s32 1, %s6
  %s9 = scalar_select 0, %s8, %s6
  $region1: #{_mlp_forward.1} parent=0
    #allocation2 [shape = 'u8[8192]{0}', space=vmem, size = 0x2000, scoped, tag = 'output window, operand 0, single buffered']
    #allocation3 [shape = 's32[1]{0}', space=sflag, size = 0x4, scoped, tag = 'scoped memory for _mlp_forward.1']
    %10 = vsyncpa [#allocation3], 0
    // Predicated region
    $region2: #{_mlp_forward.1} parent=1 // pred_check
      _
    $region3: #{_mlp_forward.1} parent=1 // pred_check_branch
      %12 = sbr.rel (0) target = $region5
    $region4: #{_mlp_forward.1} parent=1 // pred_region
      _
    $region5: #{_mlp_forward.1} parent=1 // pred_fallthru
      _
    // Predicated region
    $region6: #{_mlp_forward.1} parent=1 // pred_check
      _
    $region7: #{_mlp_forward.1} parent=1 // pred_check_branch
      %14 = sbr.rel (0) target = $region9
    $region8: #{_mlp_forward.1} parent=1 // pred_region
      _
    $region9: #{_mlp_forward.1} parent=1 // pred_fallthru
      _
    // Predicated region
    $region10: #{_mlp_forward.1} parent=1 // pred_check
      _
    $region11: #{_mlp_forward.1} parent=1 // pred_check_branch
      %16 = sbr.rel (0) target = $region13
    $region12: #{_mlp_forward.1} parent=1 // pred_region
      _
    $region13: #{_mlp_forward.1} parent=1 // pred_fallthru
      _
    // Predicated region
    $region14: #{_mlp_forward.1} parent=1 // pred_check
      _
    $region15: #{_mlp_forward.1} parent=1 // pred_check_branch
      %18 = sbr.rel (0) target = $region17
    $region16: #{_mlp_forward.1} parent=1 // pred_region
      _
    $region17: #{_mlp_forward.1} parent=1 // pred_fallthru
      _
    // Predicated region
    $region18: #{_mlp_forward.1} parent=1 // pred_check
      _
    $region19: #{_mlp_forward.1} parent=1 // pred_check_branch
      %20 = sbr.rel (0) target = $region21
    $region20: #{_mlp_forward.1} parent=1 // pred_region
      _
    $region21: #{_mlp_forward.1} parent=1 // pred_fallthru
      _
    %v22 = vld [vmem:[%s0] sm:$0xff]
    %v23 = vld [vmem:[%s0 + $0x8] sm:$0xff]
    %v24 = vpack.c.bf16 %v23, %v22
    %v25 = vld [vmem:[%s1] sm:$0xf]
    %v26 = vld [vmem:[%s1 + $0x4] sm:$0xf]
    %v27 = vld [vmem:[%s1 + $0x8] sm:$0xf]
    %v28 = vld [vmem:[%s1 + $0xc] sm:$0xf]
    %v29 = vld [vmem:[%s2] sm:$0x1]
    %v31 = vlaneseq
    %v32 = vshrl.u32 %v31, 7
    %v33 = vsub.s32 0, %v32
    %v34 = vrot.slane %v29, %v33
    %v40 = vunpack.c.l.b16 %v25
    %v41 = vunpack.c.l.b16 %v26
    %v42 = vunpack.c.l.b16 %v27
    %v43 = vunpack.c.l.b16 %v28
    %v44 = vpack.c.b16 %v41, %v40
    %v45 = vpack.c.b16 %v43, %v42
    %vm48 = vcmask 261120
    %v50 = vsel %vm48, %v24, 0
    %52 = vmatprep.subr.bf16.mxu0 0
    %53 = vmatpush1.bf16.msra.mxu0 %v44
    %54 = vmatprep.subr.bf16.mxu0 0
    %55 = vmatpush1.bf16.msra.mxu0 %v45
    %56 = vmatprep.subr.bf16.mxu0 0
    %57 = vmatpush1.bf16.msra.mxu0 0
    %58 = vmatprep.subr.bf16.mxu0 0
    %59 = vmatpush1.bf16.msra.mxu0 0
    %60 = vmatprep.subr.bf16.mxu0 0
    %61 = vmatpush1.bf16.msra.mxu0 0
    %62 = vmatprep.subr.bf16.mxu0 0
    %63 = vmatpush1.bf16.msra.mxu0 0
    %64 = vmatprep.subr.bf16.mxu0 0
    %65 = vmatpush1.bf16.msra.mxu0 0
    %66 = vmatprep.subr.bf16.mxu0 0
    %67 = vmatpush1.bf16.msra.mxu0 0
    %68 = vmatprep.subr.bf16.mxu0 0
    %69 = vmatpush1.bf16.msra.mxu0 0
    %70 = vmatprep.subr.bf16.mxu0 0
    %71 = vmatpush1.bf16.msra.mxu0 0
    %72 = vmatprep.subr.bf16.mxu0 0
    %73 = vmatpush1.bf16.msra.mxu0 0
    %74 = vmatprep.subr.bf16.mxu0 0
    %75 = vmatpush1.bf16.msra.mxu0 0
    %76 = vmatprep.subr.bf16.mxu0 0
    %77 = vmatpush1.bf16.msra.mxu0 0
    %78 = vmatprep.subr.bf16.mxu0 0
    %79 = vmatpush1.bf16.msra.mxu0 0
    %80 = vmatprep.subr.bf16.mxu0 0
    %81 = vmatpush1.bf16.msra.mxu0 0
    %82 = vmatprep.subr.bf16.mxu0 0
    %83 = vmatpush1.bf16.msra.mxu0 0
    %84 = vmatprep.mubr.bf16.mxu0 0
    %85 = vmatmul.mubr.bf16.gmra.mrb[0].mxu0 %v50
    %v86 = vpop.f32.mrb[0].mxu0
    %v87 = vadd.f32 %v34, %v86
    %v88 = vpop.f32.mrb[0].mxu0
    %v89 = vpop.f32.mrb[0].mxu0
    %v90 = vadd.f32 %v34, %v89
    %v91 = vpop.f32.mrb[0].mxu0
    %92 = vdwg.mxu0
    %v93 = vmax.f32 %v87, 0.0
    %v94 = vmax.f32 %v90, 0.0
    %v95 = vpack.c.bf16 %v94, %v93
    %v96 = vld [vmem:[%s3] sm:$0xf]
    %v97 = vld [vmem:[%s3 + $0x4] sm:$0xf]
    %v98 = vld [vmem:[%s3 + $0x8] sm:$0xf]
    %v99 = vld [vmem:[%s3 + $0xc] sm:$0xf]
    %v100 = vld [vmem:[%s3 + $0x10] sm:$0xf]
    %v101 = vld [vmem:[%s3 + $0x14] sm:$0xf]
    %v102 = vld [vmem:[%s3 + $0x18] sm:$0xf]
    %v103 = vld [vmem:[%s3 + $0x1c] sm:$0xf]
    %v104 = vld [vmem:[%s3 + $0x20] sm:$0xf]
    %v105 = vld [vmem:[%s3 + $0x24] sm:$0xf]
    %v106 = vld [vmem:[%s3 + $0x28] sm:$0xf]
    %v107 = vld [vmem:[%s3 + $0x2c] sm:$0xf]
    %v108 = vld [vmem:[%s3 + $0x30] sm:$0xf]
    %v109 = vld [vmem:[%s3 + $0x34] sm:$0xf]
    %v110 = vld [vmem:[%s3 + $0x38] sm:$0xf]
    %v111 = vld [vmem:[%s3 + $0x3c] sm:$0xf]
    %v112 = vld [vmem:[%s4] sm:$0x1]
    %v114 = vlaneseq
    %v115 = vshrl.u32 %v114, 7
    %v116 = vsub.s32 0, %v115
    %v117 = vrot.slane %v112, %v116
    %v135 = vunpack.c.l.b16 %v96
    %v136 = vunpack.c.l.b16 %v97
    %v137 = vunpack.c.l.b16 %v98
    %v138 = vunpack.c.l.b16 %v99
    %v139 = vunpack.c.l.b16 %v100
    %v140 = vunpack.c.l.b16 %v101
    %v141 = vunpack.c.l.b16 %v102
    %v142 = vunpack.c.l.b16 %v103
    %v143 = vunpack.c.l.b16 %v104
    %v144 = vunpack.c.l.b16 %v105
    %v145 = vunpack.c.l.b16 %v106
    %v146 = vunpack.c.l.b16 %v107
    %v147 = vunpack.c.l.b16 %v108
    %v148 = vunpack.c.l.b16 %v109
    %v149 = vunpack.c.l.b16 %v110
    %v150 = vunpack.c.l.b16 %v111
    %v151 = vpack.c.b16 %v136, %v135
    %v152 = vpack.c.b16 %v138, %v137
    %v153 = vpack.c.b16 %v140, %v139
    %v154 = vpack.c.b16 %v142, %v141
    %v155 = vpack.c.b16 %v144, %v143
    %v156 = vpack.c.b16 %v146, %v145
    %v157 = vpack.c.b16 %v148, %v147
    %v158 = vpack.c.b16 %v150, %v149
    %167 = vmatprep.subr.bf16.mxu0 0
    %168 = vmatpush1.bf16.msra.mxu0 %v151
    %169 = vmatprep.subr.bf16.mxu0 0
    %170 = vmatpush1.bf16.msra.mxu0 %v152
    %171 = vmatprep.subr.bf16.mxu0 0
    %172 = vmatpush1.bf16.msra.mxu0 %v153
    %173 = vmatprep.subr.bf16.mxu0 0
    %174 = vmatpush1.bf16.msra.mxu0 %v154
    %175 = vmatprep.subr.bf16.mxu0 0
    %176 = vmatpush1.bf16.msra.mxu0 %v155
    %177 = vmatprep.subr.bf16.mxu0 0
    %178 = vmatpush1.bf16.msra.mxu0 %v156
    %179 = vmatprep.subr.bf16.mxu0 0
    %180 = vmatpush1.bf16.msra.mxu0 %v157
    %181 = vmatprep.subr.bf16.mxu0 0
    %182 = vmatpush1.bf16.msra.mxu0 %v158
    %183 = vmatprep.subr.bf16.mxu0 0
    %184 = vmatpush1.bf16.msra.mxu0 0
    %185 = vmatprep.subr.bf16.mxu0 0
    %186 = vmatpush1.bf16.msra.mxu0 0
    %187 = vmatprep.subr.bf16.mxu0 0
    %188 = vmatpush1.bf16.msra.mxu0 0
    %189 = vmatprep.subr.bf16.mxu0 0
    %190 = vmatpush1.bf16.msra.mxu0 0
    %191 = vmatprep.subr.bf16.mxu0 0
    %192 = vmatpush1.bf16.msra.mxu0 0
    %193 = vmatprep.subr.bf16.mxu0 0
    %194 = vmatpush1.bf16.msra.mxu0 0
    %195 = vmatprep.subr.bf16.mxu0 0
    %196 = vmatpush1.bf16.msra.mxu0 0
    %197 = vmatprep.subr.bf16.mxu0 0
    %198 = vmatpush1.bf16.msra.mxu0 0
    %199 = vmatprep.mubr.bf16.mxu0 0
    %200 = vmatmul.mubr.bf16.gmra.mrb[0].mxu0 %v95
    %v201 = vpop.f32.mrb[0].mxu0
    %v202 = vadd.f32 %v117, %v201
    %v203 = vpop.f32.mrb[0].mxu0
    %v204 = vpop.f32.mrb[0].mxu0
    %v205 = vadd.f32 %v117, %v204
    %v206 = vpop.f32.mrb[0].mxu0
    %207 = vdwg.mxu0
    %208 = vst.msk [vmem:[#allocation2] sm:$0xff] %vm48, %v202
    %209 = vst.msk [vmem:[#allocation2 + $0x8] sm:$0xff] %vm48, %v205
    // Predicated region
    $region22: #{_mlp_forward.1} parent=1 // pred_check
      _
    $region23: #{_mlp_forward.1} parent=1 // pred_check_branch
      %211 = sbr.rel (0) target = $region25
    $region24: #{_mlp_forward.1} parent=1 // pred_region
      %s213 = ssub.s32 256, 128
      %214 = vsyncadd [#allocation3], %s213
      %s215 = sshll.u32 [#allocation2], 4
      %s216 = int_to_ptr.vmem [resolvable:$true] %s215
      %221 = dma.vmem_to_hbm [thread:$0]  %s216, 128, %s5, [#allocation3], 128, 128, 8
    $region25: #{_mlp_forward.1} parent=1 // pred_fallthru
      _
    // Predicated region
    $region26: #{_mlp_forward.1} parent=1 // pred_check
      _
    $region27: #{_mlp_forward.1} parent=1 // pred_check_branch
      %223 = sbr.rel (0) target = $region29
    $region28: #{_mlp_forward.1} parent=1 // pred_region
      %224 = dma.done [#allocation3], 256
    $region29: #{_mlp_forward.1} parent=1 // pred_fallthru
      _
    %225 = vsyncpa [#allocation3], 1

</llo_original>
